<compile_context>
chip_gen: v7x
topology: tpu7x:2x2x1
jax: 0.10.0
libtpu: 0.0.40
codegen_flags: <defaults>
</compile_context>

<pallas_src>
import functools

import jax
import jax.numpy as jnp
from jax.experimental import pallas as pl
from jax.experimental.pallas import tpu as pltpu


def _round_up(x, m):
    return ((x + m - 1) // m) * m


def _tpu_caps():
    """Best-effort (vmem_capacity_bytes, tensorcores_per_chip) with fallbacks."""
    vmem = 128 << 20
    cores = 1
    try:
        info = pltpu.get_tpu_info()
        for name in ("vmem_capacity_bytes", "vmem_bytes", "vmem_size_bytes"):
            v = getattr(info, name, None)
            if v:
                vmem = int(v)
                break
        for name in ("num_tensorcores", "tensorcores_per_chip",
                     "cores_per_chip", "num_cores"):
            v = getattr(info, name, None)
            if v:
                cores = int(v)
                break
    except Exception:
        pass
    try:
        kind = jax.devices()[0].device_kind.lower()
        if "v7" in kind:            # v7x: 2 TensorCores, 64 MiB VMEM per TC
            cores = max(cores, 2)
            vmem = min(vmem, 64 << 20)
    except Exception:
        pass
    return vmem, cores


def _pick_tile_rows(n, c, in_bytes, budget_bytes):
    """Largest row tile (multiple of 8) whose working set fits the VMEM budget.

    Working set per grid step ~= 2 double-buffered (TN, C) input tiles,
    ~4 live f32 (TN, C) temporaries after fusion, plus a handful of
    lane-padded (TN, 1) f32 row-stats (512 B/row each in (8,128) layout) --
    the row-stats dominate when C is small.
    """
    per_row = c * (2 * in_bytes + 4 * 4) + 5 * 512
    tn = (budget_bytes // max(per_row, 1)) // 8 * 8
    # Per-step-bytes floor: keep each step's logits DMA >= ~1 MiB so the
    # ~0.35 us fixed per-step pipeline overhead stays amortized for small C.
    floor_rows = _round_up(pl.cdiv(1 << 20, max(c * in_bytes, 1)), 8)
    tn = max(tn, min(floor_rows, 4096), 8)
    tn = min(tn, 8192)                      # vreg / spill-pressure sanity cap
    tn = min(tn, _round_up(n, 8))           # never bigger than (padded) N
    return int(tn)


def _focal_loss_kernel(x_ref, t_ref, out_ref, *, alpha, gamma, n_rows,
                       tile_rows, tiles_per_part):
    # x_ref: (TN, C) logits tile; t_ref: (TN, 1) int32 targets tile;
    # out_ref: (1, 1, 128) f32 partial-sum accumulator, resident across the
    # inner reduction axis (one block per parallel part).
    p = pl.program_id(0)          # parallel part (megacore split)
    i = pl.program_id(1)          # row-tile index within the part (reduction)

    @pl.when(i == 0)
    def _():
        out_ref[...] = jnp.zeros_like(out_ref)

    # Logical (unclamped) rows covered by this step; rows >= n_rows are
    # padding (partial last tile / duplicated clamped tiles) -> masked below.
    blk = p * tiles_per_part + i
    row_ids = blk * tile_rows + jax.lax.broadcasted_iota(
        jnp.int32, (tile_rows, 1), 0)
    valid = row_ids < n_rows                                     # (TN, 1)

    x = x_ref[...].astype(jnp.float32)                           # (TN, C)
    t = t_ref[...]                                               # (TN, 1)

    # Numerically stable cross-entropy pieces.
    m = jnp.max(x, axis=-1, keepdims=True)                       # (TN, 1)
    e = jnp.exp(x - m)                                           # (TN, C)
    sum_e = jnp.sum(e, axis=-1, keepdims=True)                   # (TN, 1)

    col = jax.lax.broadcasted_iota(jnp.int32, x.shape, 1)        # (TN, C)
    logit_t = jnp.sum(jnp.where(col == t, x, 0.0),
                      axis=-1, keepdims=True)                    # x[target]

    # ce = logsumexp(x) - x[target];  pt = exp(-ce) = softmax(x)[target]
    ce = jnp.log(sum_e) - (logit_t - m)                          # (TN, 1)
    pt = jnp.exp(-ce)                                            # (TN, 1), EUP
    one_minus_pt = jnp.maximum(1.0 - pt, 0.0)                    # clamp

    g = float(gamma)
    if g == int(g) and 0 <= int(g) <= 4:
        # Integer gamma (module default 2): pure-VPU multiply chain.
        w = jnp.ones_like(one_minus_pt)
        for _ in range(int(g)):
            w = w * one_minus_pt
    else:
        w = one_minus_pt ** jnp.float32(g)

    focal = jnp.float32(alpha) * w * ce                          # (TN, 1)
    # Select-based masking (NaN/Inf in garbage rows cannot leak into the sum).
    tile_sum = jnp.sum(jnp.where(valid, focal, 0.0))
    out_ref[...] += tile_sum


def focal_loss(inputs, targets, *, alpha=1.0, gamma=2.0, reduction="mean",
               tile_rows=None, num_parts=None):
    """Pallas FocalLoss. inputs: (N, C) float logits (f32 or bf16),
    targets: (N,) int class indices."""
    if reduction not in ("mean", "sum"):
        # TODO(synk): reduction='none' (per-element focal output) is not fused.
        raise NotImplementedError("only 'mean' and 'sum' reductions are fused")

    n, c = inputs.shape
    targets_2d = targets.astype(jnp.int32).reshape(n, 1)
    in_bytes = jnp.dtype(inputs.dtype).itemsize

    vmem_cap, cores = _tpu_caps()
    # v7x has only 64 MiB VMEM/TC -> smaller tile budget; v5e/v6e (128 MiB)
    # get the larger budget so tile_rows lands in the 85%+ HBM-roofline band.
    budget = (20 << 20) if vmem_cap <= (64 << 20) else (24 << 20)

    if tile_rows is None:
        tile_rows = _pick_tile_rows(n, c, in_bytes, budget)
    tile_rows = max(8, _round_up(int(tile_rows), 8))

    n_blocks = int(pl.cdiv(n, tile_rows))
    if num_parts is None:
        num_parts = cores            # 2 on v7x, 1 on single-TC v5e/v6e
    num_parts = int(max(1, min(num_parts, n_blocks)))
    tiles_per_part = int(pl.cdiv(n_blocks, num_parts))

    def row_map(p, i):
        # Clamp so duplicated tail blocks stay in-bounds; their rows are
        # masked inside the kernel via the (unclamped) logical row index.
        blk = jnp.minimum(p * tiles_per_part + i, n_blocks - 1)
        return (blk, 0)

    kernel = functools.partial(
        _focal_loss_kernel,
        alpha=float(alpha), gamma=float(gamma), n_rows=n,
        tile_rows=tile_rows, tiles_per_part=tiles_per_part,
    )

    # Explicit VMEM limit sized from the chosen tile, capped per generation.
    vmem_need = (2 * tile_rows * c * in_bytes      # double-buffered logits
                 + 2 * tile_rows * 512             # double-buffered targets (lane-padded)
                 + 4 * tile_rows * c * 4           # live f32 (TN, C) temporaries
                 + 6 * tile_rows * 512             # lane-padded (TN, 1) row stats
                 + (2 << 20))                      # pipeline bookkeeping headroom
    hard_cap = (40 << 20) if vmem_cap <= (64 << 20) else (96 << 20)
    vmem_limit = int(min(max(vmem_need, 8 << 20), hard_cap))

    partials = pl.pallas_call(
        kernel,
        out_shape=jax.ShapeDtypeStruct((num_parts, 1, 128), jnp.float32),
        grid=(num_parts, tiles_per_part),
        in_specs=[
            pl.BlockSpec((tile_rows, c), row_map),   # logits row tile
            pl.BlockSpec((tile_rows, 1), row_map),   # targets column, same rows
        ],
        out_specs=pl.BlockSpec((1, 1, 128), lambda p, i: (p, 0, 0)),
        compiler_params=pltpu.CompilerParams(
            dimension_semantics=("parallel", "arbitrary"),
            vmem_limit_bytes=vmem_limit,
        ),
        cost_estimate=pl.CostEstimate(
            flops=int(8 * n * c),
            transcendentals=int(n * c + 2 * n),
            bytes_accessed=int(n * c * in_bytes + n * 4 + num_parts * 512),
        ),
    )(inputs, targets_2d)

    total = jnp.sum(partials[:, 0, 0])
    if reduction == "mean":
        return total / jnp.float32(n)
    return total  # 'sum'


def _focal_loss_ref(inputs, targets, alpha=1.0, gamma=2.0, reduction="mean"):
    # Pure-JAX reference mirroring F.cross_entropy(reduction='none') + focal.
    x = inputs.astype(jnp.float32)
    logp = jax.nn.log_softmax(x, axis=-1)
    ce = -jnp.take_along_axis(logp, targets[:, None].astype(jnp.int32),
                              axis=-1)[:, 0]
    pt = jnp.exp(-ce)
    fl = alpha * (1.0 - pt) ** gamma * ce
    return jnp.mean(fl) if reduction == "mean" else jnp.sum(fl)


if __name__ == "__main__":
    key = jax.random.PRNGKey(0)
    k_x, k_t, k_x2, k_t2 = jax.random.split(key, 4)

    # Case 1: 200 rows x 32 classes, bf16 logits, forced tile_rows=48 and
    # num_parts=2 -> exercises the partial tail tile, the duplicated clamped
    # tail block of the second part, and the parallel-part accumulator path.
    N1, C1 = 200, 32
    logits1 = jax.random.normal(k_x, (N1, C1), jnp.float32).astype(jnp.bfloat16)
    targets1 = jax.random.randint(k_t, (N1,), 0, C1, dtype=jnp.int32)
    out1 = focal_loss(logits1, targets1, alpha=1.0, gamma=2.0,
                      reduction="mean", tile_rows=48, num_parts=2)
    out1 = jax.block_until_ready(out1)
    ref1 = _focal_loss_ref(logits1, targets1, 1.0, 2.0, "mean")
    assert jnp.allclose(out1, ref1, atol=2e-3, rtol=2e-3), (out1, ref1)

    # Case 2: 160 rows x 8 classes, f32 logits, automatic (generation-aware)
    # tile / part selection, 'sum' reduction.
    N2, C2 = 160, 8
    logits2 = jax.random.normal(k_x2, (N2, C2), jnp.float32)
    targets2 = jax.random.randint(k_t2, (N2,), 0, C2, dtype=jnp.int32)
    out2 = focal_loss(logits2, targets2, alpha=0.5, gamma=2.0, reduction="sum")
    out2 = jax.block_until_ready(out2)
    ref2 = _focal_loss_ref(logits2, targets2, 0.5, 2.0, "sum")
    assert jnp.allclose(out2, ref2, atol=2e-3, rtol=2e-3), (out2, ref2)

    print("KERNEL_OK")
</pallas_src>

<mosaic_0001>
module attributes {stable_mosaic.version = 11 : i64} {
  func.func @_focal_loss_kernel(%arg0: i32, %arg1: i32, %arg2: memref<48x32xbf16, #tpu.memory_space<vmem>>, %arg3: memref<48x1xi32, #tpu.memory_space<vmem>>, %arg4: memref<1x1x128xf32, #tpu.memory_space<vmem>>) attributes {dimension_semantics = [#tpu.dimension_semantics<parallel>, #tpu.dimension_semantics<arbitrary>], iteration_bounds = array<i64: 2, 3>, scalar_prefetch = 0 : i64, scratch_operands = 0 : i64, tpu.core_type = #tpu.core_type<tc>, window_params = [{transform_indices = @transform_0, window_bounds = array<i64: 48, 32>}, {transform_indices = @transform_1, window_bounds = array<i64: 48, 1>}, {transform_indices = @transform_2, window_bounds = array<i64: 1, 1, 128>}]} {
    %c0_i32 = arith.constant 0 : i32
    %0 = arith.cmpi eq, %arg1, %c0_i32 : i32
    %1 = arith.extui %0 : i1 to i32
    %c0_i32_0 = arith.constant 0 : i32
    %2 = arith.cmpi ne, %1, %c0_i32_0 : i32
    scf.if %2 {
      %cst_20 = arith.constant 0.000000e+00 : f32
      %54 = vector.broadcast %cst_20 : f32 to vector<1x1x128xf32>
      %c0_21 = arith.constant 0 : index
      %c0_22 = arith.constant 0 : index
      %c0_23 = arith.constant 0 : index
      %55 = vector.load %arg4[%c0_21, %c0_22, %c0_23] : memref<1x1x128xf32, #tpu.memory_space<vmem>>, vector<1x1x128xf32>
      tpu.vector_store %arg4[%c0_21, %c0_22, %c0_23], %54 {strides = array<i32>} : memref<1x1x128xf32, #tpu.memory_space<vmem>>, vector<1x1x128xf32>,
    } else {
    }
    %c3_i32 = arith.constant 3 : i32
    %3 = arith.muli %arg0, %c3_i32 : i32
    %4 = arith.addi %3, %arg1 : i32
    %c48_i32 = arith.constant 48 : i32
    %5 = arith.muli %4, %c48_i32 : i32
    %6 = tpu.iota {dimensions = array<i32: 0>} : vector<48x1xi32>
    %7 = vector.broadcast %5 : i32 to vector<48x1xi32>
    %8 = arith.addi %7, %6 : vector<48x1xi32>
    %c200_i32 = arith.constant 200 : i32
    %9 = vector.broadcast %c200_i32 : i32 to vector<48x1xi32>
    %10 = arith.cmpi slt, %8, %9 : vector<48x1xi32>
    %c0 = arith.constant 0 : index
    %c0_1 = arith.constant 0 : index
    %11 = vector.load %arg2[%c0, %c0_1] : memref<48x32xbf16, #tpu.memory_space<vmem>>, vector<48x32xbf16>
    %12 = arith.extf %11 : vector<48x32xbf16> to vector<48x32xf32>
    %c0_2 = arith.constant 0 : index
    %c0_3 = arith.constant 0 : index
    %13 = vector.load %arg3[%c0_2, %c0_3] : memref<48x1xi32, #tpu.memory_space<vmem>>, vector<48x1xi32>
    %cst = arith.constant dense<0xFF800000> : vector<48xf32>
    %14 = vector.multi_reduction <maximumf>, %12, %cst [1] : vector<48x32xf32> to vector<48xf32>
    %15 = vector.shape_cast %14 : vector<48xf32> to vector<48x1xf32>
    %16 = vector.broadcast %15 : vector<48x1xf32> to vector<48x32xf32>
    %17 = arith.subf %12, %16 : vector<48x32xf32>
    %18 = math.exp %17 : vector<48x32xf32>
    %cst_4 = arith.constant dense<0.000000e+00> : vector<48xf32>
    %19 = vector.multi_reduction <add>, %18, %cst_4 [1] : vector<48x32xf32> to vector<48xf32>
    %20 = vector.shape_cast %19 : vector<48xf32> to vector<48x1xf32>
    %21 = tpu.iota {dimensions = array<i32: 1>} : vector<48x32xi32>
    %22 = vector.broadcast %13 : vector<48x1xi32> to vector<48x32xi32>
    %23 = arith.cmpi eq, %21, %22 : vector<48x32xi32>
    %cst_5 = arith.constant 0.000000e+00 : f32
    %24 = vector.broadcast %cst_5 : f32 to vector<48x32xf32>
    %25 = arith.select %23, %12, %24 : vector<48x32xi1>, vector<48x32xf32>
    %cst_6 = arith.constant dense<0.000000e+00> : vector<48xf32>
    %26 = vector.multi_reduction <add>, %25, %cst_6 [1] : vector<48x32xf32> to vector<48xf32>
    %27 = vector.shape_cast %26 : vector<48xf32> to vector<48x1xf32>
    %28 = math.log %20 : vector<48x1xf32>
    %29 = arith.subf %27, %15 : vector<48x1xf32>
    %30 = arith.subf %28, %29 : vector<48x1xf32>
    %cst_7 = arith.constant 0.000000e+00 : f32
    %31 = vector.broadcast %cst_7 : f32 to vector<48x1xf32>
    %32 = arith.subf %31, %30 : vector<48x1xf32>
    %33 = math.exp %32 : vector<48x1xf32>
    %cst_8 = arith.constant 1.000000e+00 : f32
    %34 = vector.broadcast %cst_8 : f32 to vector<48x1xf32>
    %35 = arith.subf %34, %33 : vector<48x1xf32>
    %cst_9 = arith.constant 0.000000e+00 : f32
    %36 = vector.broadcast %cst_9 : f32 to vector<48x1xf32>
    %37 = arith.maximumf %35, %36 : vector<48x1xf32>
    %cst_10 = arith.constant 1.000000e+00 : f32
    %38 = vector.broadcast %cst_10 : f32 to vector<48x1xf32>
    %39 = arith.mulf %38, %37 : vector<48x1xf32>
    %40 = arith.mulf %39, %37 : vector<48x1xf32>
    %cst_11 = arith.constant 1.000000e+00 : f32
    %41 = vector.broadcast %cst_11 : f32 to vector<48x1xf32>
    %42 = arith.mulf %41, %40 : vector<48x1xf32>
    %43 = arith.mulf %42, %30 : vector<48x1xf32>
    %cst_12 = arith.constant 0.000000e+00 : f32
    %44 = vector.broadcast %cst_12 : f32 to vector<48x1xf32>
    %45 = arith.select %10, %43, %44 : vector<48x1xi1>, vector<48x1xf32>
    %46 = vector.shape_cast %45 : vector<48x1xf32> to vector<1x48x1xf32>
    %cst_13 = arith.constant dense<0.000000e+00> : vector<1xf32>
    %47 = vector.multi_reduction <add>, %46, %cst_13 [1, 2] : vector<1x48x1xf32> to vector<1xf32>
    %48 = vector.shape_cast %47 : vector<1xf32> to vector<1x1x1xf32>
    %49 = vector.extract %48[0, 0, 0] : f32 from vector<1x1x1xf32>
    %c0_14 = arith.constant 0 : index
    %c0_15 = arith.constant 0 : index
    %c0_16 = arith.constant 0 : index
    %50 = vector.load %arg4[%c0_14, %c0_15, %c0_16] : memref<1x1x128xf32, #tpu.memory_space<vmem>>, vector<1x1x128xf32>
    %51 = vector.broadcast %49 : f32 to vector<1x1x128xf32>
    %52 = arith.addf %50, %51 : vector<1x1x128xf32>
    %c0_17 = arith.constant 0 : index
    %c0_18 = arith.constant 0 : index
    %c0_19 = arith.constant 0 : index
    %53 = vector.load %arg4[%c0_17, %c0_18, %c0_19] : memref<1x1x128xf32, #tpu.memory_space<vmem>>, vector<1x1x128xf32>
    tpu.vector_store %arg4[%c0_17, %c0_18, %c0_19], %52 {strides = array<i32>} : memref<1x1x128xf32, #tpu.memory_space<vmem>>, vector<1x1x128xf32>,
    return
  }
  func.func @transform_0(%arg0: i32, %arg1: i32) -> (i32, i32) {
    %c3_i32 = arith.constant 3 : i32
    %0 = arith.muli %arg0, %c3_i32 : i32
    %1 = arith.addi %0, %arg1 : i32
    %c4_i32 = arith.constant 4 : i32
    %2 = arith.minsi %1, %c4_i32 : i32
    %c0_i32 = arith.constant 0 : i32
    %c0_i32_0 = arith.constant 0 : i32
    return %2, %c0_i32 : i32, i32
  }
  func.func @transform_1(%arg0: i32, %arg1: i32) -> (i32, i32) {
    %c3_i32 = arith.constant 3 : i32
    %0 = arith.muli %arg0, %c3_i32 : i32
    %1 = arith.addi %0, %arg1 : i32
    %c4_i32 = arith.constant 4 : i32
    %2 = arith.minsi %1, %c4_i32 : i32
    %c0_i32 = arith.constant 0 : i32
    %c0_i32_0 = arith.constant 0 : i32
    return %2, %c0_i32 : i32, i32
  }
  func.func @transform_2(%arg0: i32, %arg1: i32) -> (i32, i32, i32) {
    %c0_i32 = arith.constant 0 : i32
    %c0_i32_0 = arith.constant 0 : i32
    %c0_i32_1 = arith.constant 0 : i32
    return %arg0, %c0_i32, %c0_i32_0 : i32, i32, i32
  }
}

</mosaic_0001>

<llo_original>
// kernel: tpu_custom_call.1
$region0: #{tpu_custom_call.1}
  #allocation0 [shape = 'u32[]', space=smem, size = 0x4, offset = 0x4, fixed_abs, tag = 'smem constant byte address 0x4 - core index']
  #allocation1 [shape = 'u32[144,128]{1,0:T(1,128)}', space=vmem, size = 0x12000, scoped, tag = 'internal scratch']
  %s0 = inlined_call_operand.vmem [shape: bf16[200,32], index: 0, kind: input, shape index: {}]
  %s1 = inlined_call_operand.vmem [shape: s32[200,1], index: 1, kind: input, shape index: {}]
  %s2 = inlined_call_operand.hbm [shape: f32[2,1,128], index: 2, kind: output, shape index: {}]
  %s3 = sld [smem:[#allocation0]]
  $region45: #{tpu_custom_call.1} parent=0
    _
  %s5 = ssub.s32 1, %s3
  %s6 = scalar_select 0, %s5, %s3
  $region1: #{tpu_custom_call.1} parent=0
    #allocation2 [shape = 'u8[1024]{0}', space=vmem, size = 0x400, scoped, tag = 'output window, operand 0']
    #allocation3 [shape = 's32[2]{0}', space=sflag, size = 0x8, scoped, tag = 'scoped memory for tpu_custom_call.1']
    %7 = vsyncpa [#allocation3], 0
    %s8 = scalar_lea.sflag [#allocation3], 1
    %9 = vsyncpa %s8, 0
    loop: start=0, step=1, limit=8
    $region2: #{tpu_custom_call.1} parent=1 // loop_pre_header
      _
    $region3: #{tpu_custom_call.1} parent=1 // loop_header
      %s11 = sphi 0, %s15
      %p12 = scmp.ge.s32.totalorder %s11, 8
      %s18 = sphi 0, %s30
      %s19 = sphi 0, %s26
      %s20 = sphi 0, %s18
      %s21 = sphi 0, %s19
      %s22 = sphi 0, %s20
      %s23 = sphi 0, %s21
      %s41 = sphi 0, %s43
      %s44 = sphi 0, %s41
      %s45 = sphi 0, %s44
      %s61 = sphi 0, %s45
      %s75 = sphi 0, %s77
      %s78 = sphi 0, %s75
      %s79 = sphi 0, %s78
      %s95 = sphi 0, %s79
      %s101 = sphi 0, %s103
      %s104 = sphi 0, %s101
      %s105 = sphi 0, %s104
      %s121 = sphi 0, %s105
    $region4: #{tpu_custom_call.1} parent=1 // loop_header_branch
      %14 = sbr.rel (%p12) target = $region8
    $region5: #{tpu_custom_call.1} parent=1 // loop_body
      %s16 = ssub.s32 %s11, 1
      %s17 = ssub.s32 %s11, 2
      %s24 = sadd.s32 1, %s19
      %p25 = scmp.ge.s32.totalorder %s24, 3
      %s26 = scalar_select %p25, 0, %s24
      %s27 = sadd.s32 1, %s18
      %s28 = scalar_select %p25, %s27, %s18
      %p29 = scmp.ge.s32.totalorder %s28, 2
      %s30 = scalar_select %p29, 0, %s28
      %s31 = smul.u32 %s18, 3
      %s32 = sadd.s32 %s31, %s19
      %p33 = scmp.lt.s32.totalorder %s32, 4
      %s34 = scalar_select %p33, %s32, 4
      %s35 = smul.u32 %s30, 3
      %s36 = sadd.s32 %s35, %s26
      %p37 = scmp.lt.s32.totalorder %s36, 4
      %s38 = scalar_select %p37, %s36, 4
      %s39 = ssub.s32 %s34, %s38
      %p40 = scmp.eq.s32.totalorder %s39, 0
      %s42 = sadd.s32 %s41, 1
      %s43 = scalar_select %p40, %s41, %s42
      %p46 = pneg %p40
      %p47 = scmp.eq.s32.totalorder %s11, 5
      %p48 = por %p46, %p47
      %p49 = scmp.ne.s32.totalorder %s41, %s44
      %p50 = scmp.eq.s32.totalorder %s11, 0
      %p51 = por %p49, %p50
      %p52 = scmp.ne.s32.totalorder %s41, %s44
      %p53 = scmp.eq.s32.totalorder %s16, 5
      %p54 = por %p52, %p53
      %p55 = scmp.ne.s32.totalorder %s44, %s45
      %p56 = scmp.eq.s32.totalorder %s16, 0
      %p57 = por %p55, %p56
      %p58 = scmp.ne.s32.totalorder %s44, %s45
      %p59 = scmp.eq.s32.totalorder %s17, 5
      %p60 = por %p58, %p59
      %p62 = scmp.ne.s32.totalorder %s45, %s61
      %p63 = scmp.eq.s32.totalorder %s17, 0
      %p64 = por %p62, %p63
      %s65 = smul.u32 %s18, 3
      %s66 = sadd.s32 %s65, %s19
      %p67 = scmp.lt.s32.totalorder %s66, 4
      %s68 = scalar_select %p67, %s66, 4
      %s69 = smul.u32 %s30, 3
      %s70 = sadd.s32 %s69, %s26
      %p71 = scmp.lt.s32.totalorder %s70, 4
      %s72 = scalar_select %p71, %s70, 4
      %s73 = ssub.s32 %s68, %s72
      %p74 = scmp.eq.s32.totalorder %s73, 0
      %s76 = sadd.s32 %s75, 1
      %s77 = scalar_select %p74, %s75, %s76
      %p80 = pneg %p74
      %p81 = scmp.eq.s32.totalorder %s11, 5
      %p82 = por %p80, %p81
      %p83 = scmp.ne.s32.totalorder %s75, %s78
      %p84 = scmp.eq.s32.totalorder %s11, 0
      %p85 = por %p83, %p84
      %p86 = scmp.ne.s32.totalorder %s75, %s78
      %p87 = scmp.eq.s32.totalorder %s16, 5
      %p88 = por %p86, %p87
      %p89 = scmp.ne.s32.totalorder %s78, %s79
      %p90 = scmp.eq.s32.totalorder %s16, 0
      %p91 = por %p89, %p90
      %p92 = scmp.ne.s32.totalorder %s78, %s79
      %p93 = scmp.eq.s32.totalorder %s17, 5
      %p94 = por %p92, %p93
      %p96 = scmp.ne.s32.totalorder %s79, %s95
      %p97 = scmp.eq.s32.totalorder %s17, 0
      %p98 = por %p96, %p97
      %s99 = ssub.s32 %s18, %s30
      %p100 = scmp.eq.s32.totalorder %s99, 0
      %s102 = sadd.s32 %s101, 1
      %s103 = scalar_select %p100, %s101, %s102
      %p106 = pneg %p100
      %p107 = scmp.eq.s32.totalorder %s11, 5
      %p108 = por %p106, %p107
      %p109 = scmp.ne.s32.totalorder %s101, %s104
      %p110 = scmp.eq.s32.totalorder %s11, 0
      %p111 = por %p109, %p110
      %p112 = scmp.ne.s32.totalorder %s101, %s104
      %p113 = scmp.eq.s32.totalorder %s16, 5
      %p114 = por %p112, %p113
      %p115 = scmp.ne.s32.totalorder %s104, %s105
      %p116 = scmp.eq.s32.totalorder %s16, 0
      %p117 = por %p115, %p116
      %p118 = scmp.ne.s32.totalorder %s104, %s105
      %p119 = scmp.eq.s32.totalorder %s17, 5
      %p120 = por %p118, %p119
      %p122 = scmp.ne.s32.totalorder %s105, %s121
      %p123 = scmp.eq.s32.totalorder %s17, 0
      %p124 = por %p122, %p123
      %p125 = scmp.le.s32.totalorder 1, %s11
      %p126 = scmp.lt.s32.totalorder %s11, 7
      %p127 = pnand %p125, %p126
      %p128 = pneg %p127
      // Predicated region
      $region9: #{tpu_custom_call.1} parent=5 // pred_check
        _
      $region10: #{tpu_custom_call.1} parent=5 // pred_check_branch
        %130 = sbr.rel (%p127) target = $region12
      $region11: #{tpu_custom_call.1} parent=5 // pred_region
        %s131 = ssub.s32 %s11, 1
      $region12: #{tpu_custom_call.1} parent=5 // pred_fallthru
        _
      %p132 = scmp.lt.s32.totalorder %s11, 6
      // Predicated region
      $region13: #{tpu_custom_call.1} parent=5 // pred_check
        %p133 = pneg %p132
      $region14: #{tpu_custom_call.1} parent=5 // pred_check_branch
        %135 = sbr.rel (%p133) target = $region16
      $region15: #{tpu_custom_call.1} parent=5 // pred_region
        // Predicated region
        $region17: #{tpu_custom_call.1} parent=15 // pred_check
          %p136 = pneg %p51
        $region18: #{tpu_custom_call.1} parent=15 // pred_check_branch
          %138 = sbr.rel (%p136) target = $region20
        $region19: #{tpu_custom_call.1} parent=15 // pred_region
          %s139 = smul.u32 %s18, 3
          %s140 = sadd.s32 %s139, %s19
          %p141 = scmp.lt.s32.totalorder %s140, 4
          %s142 = scalar_select %p141, %s140, 4
          %s143 = smul.u32 6, %s142
          %s144 = ssub.s32 25, %s143
          %p145 = scmp.lt.s32.totalorder %s144, 6
          %s146 = scalar_select %p145, %s144, 6
          %s147 = smul.u32 64, %s146
          %p148 = scmp.lt.s32.totalorder %s143, 24
          %s149 = scalar_select %p148, %s143, 24
          %s150 = smul.addr %s149, 4
          %s151 = scalar_lea.vmem %s0, %s150
          %s152 = smul.u32 %s18, 3
          %s153 = sadd.s32 %s152, %s19
          %p154 = scmp.lt.s32.totalorder %s153, 4
          %s155 = scalar_select %p154, %s153, 4
          %s156 = smul.u32 6, %s155
          %s157 = ssub.s32 25, %s156
          %p158 = scmp.lt.s32.totalorder %s157, 6
          %s159 = scalar_select %p158, %s157, 6
          %s160 = smul.u32 64, %s159
        $region20: #{tpu_custom_call.1} parent=15 // pred_fallthru
          _
        // Predicated region
        $region21: #{tpu_custom_call.1} parent=15 // pred_check
          %p161 = pneg %p85
        $region22: #{tpu_custom_call.1} parent=15 // pred_check_branch
          %163 = sbr.rel (%p161) target = $region24
        $region23: #{tpu_custom_call.1} parent=15 // pred_region
          %s164 = smul.u32 %s18, 3
          %s165 = sadd.s32 %s164, %s19
          %p166 = scmp.lt.s32.totalorder %s165, 4
          %s167 = scalar_select %p166, %s165, 4
          %s168 = smul.u32 6, %s167
          %s169 = ssub.s32 25, %s168
          %p170 = scmp.lt.s32.totalorder %s169, 6
          %s171 = scalar_select %p170, %s169, 6
          %s172 = smul.u32 128, %s171
          %p173 = scmp.lt.s32.totalorder %s168, 24
          %s174 = scalar_select %p173, %s168, 24
          %s175 = smul.addr %s174, 8
          %s176 = scalar_lea.vmem %s1, %s175
          %s177 = smul.u32 %s18, 3
          %s178 = sadd.s32 %s177, %s19
          %p179 = scmp.lt.s32.totalorder %s178, 4
          %s180 = scalar_select %p179, %s178, 4
          %s181 = smul.u32 6, %s180
          %s182 = ssub.s32 25, %s181
          %p183 = scmp.lt.s32.totalorder %s182, 6
          %s184 = scalar_select %p183, %s182, 6
          %s185 = smul.u32 128, %s184
        $region24: #{tpu_custom_call.1} parent=15 // pred_fallthru
          _
      $region16: #{tpu_custom_call.1} parent=5 // pred_fallthru
        _
      %p186 = scmp.le.s32.totalorder 1, %s11
      %p187 = scmp.lt.s32.totalorder %s11, 7
      %p188 = pnand %p186, %p187
      %p189 = pneg %p188
      // Predicated region
      $region25: #{tpu_custom_call.1} parent=5 // pred_check
        _
      $region26: #{tpu_custom_call.1} parent=5 // pred_check_branch
        %191 = sbr.rel (%p188) target = $region28
      $region27: #{tpu_custom_call.1} parent=5 // pred_region
        %s192 = ssub.s32 %s11, 1
        %s193 = smul.u32 %s20, 3
        %s194 = sadd.s32 %s193, %s21
        %p195 = scmp.lt.s32.totalorder %s194, 4
        %s196 = scalar_select %p195, %s194, 4
        %s197 = smul.u32 6, %s196
        %s198 = ssub.s32 25, %s197
        %p199 = scmp.lt.s32.totalorder %s198, 6
        %s200 = scalar_select %p199, %s198, 6
        %s201 = smul.u32 64, %s200
        %p202 = scmp.lt.s32.totalorder %s197, 24
        %s203 = scalar_select %p202, %s197, 24
        %s204 = smul.addr %s203, 4
        %s205 = scalar_lea.vmem %s0, %s204
        %p206 = pneg %p57
        %p207 = pneg %p54
        %s208 = smul.u32 %s20, 3
        %s209 = sadd.s32 %s208, %s21
        %p210 = scmp.lt.s32.totalorder %s209, 4
        %s211 = scalar_select %p210, %s209, 4
        %s212 = smul.u32 6, %s211
        %s213 = ssub.s32 25, %s212
        %p214 = scmp.lt.s32.totalorder %s213, 6
        %s215 = scalar_select %p214, %s213, 6
        %s216 = smul.u32 128, %s215
        %p217 = scmp.lt.s32.totalorder %s212, 24
        %s218 = scalar_select %p217, %s212, 24
        %s219 = smul.addr %s218, 8
        %s220 = scalar_lea.vmem %s1, %s219
        %p221 = pneg %p91
        %p222 = pneg %p88
        %p223 = pneg %p117
        %p224 = pneg %p114
        %s225 = sand.u32 %s104, 1
        %s226 = scalar_lea.sflag [#allocation3], %s225
        %s227 = sand.u32 %s104, 1
        %s228 = scalar_lea.vmem [#allocation2], %s227
        %s229 = smul.u32 %s20, 3
        %s230 = sadd.s32 %s229, %s21
        %p231 = scmp.lt.s32.totalorder %s230, 4
        %s232 = scalar_select %p231, %s230, 4
        %s233 = smul.u32 6, %s232
        %s234 = ssub.s32 25, %s233
        %p235 = scmp.lt.s32.totalorder %s234, 6
        %s236 = scalar_select %p235, %s234, 6
        %s237 = smul.u32 64, %s236
        %p238 = scmp.lt.s32.totalorder %s233, 24
        %s239 = scalar_select %p238, %s233, 24
        %s240 = smul.addr %s239, 4
        %s241 = scalar_lea.vmem %s0, %s240
        %s242 = smul.u32 %s20, 3
        %s243 = sadd.s32 %s242, %s21
        %p244 = scmp.lt.s32.totalorder %s243, 4
        %s245 = scalar_select %p244, %s243, 4
        %s246 = smul.u32 6, %s245
        %s247 = ssub.s32 25, %s246
        %p248 = scmp.lt.s32.totalorder %s247, 6
        %s249 = scalar_select %p248, %s247, 6
        %s250 = smul.u32 64, %s249
        %s251 = smul.u32 %s20, 3
        %s252 = sadd.s32 %s251, %s21
        %p253 = scmp.lt.s32.totalorder %s252, 4
        %s254 = scalar_select %p253, %s252, 4
        %s255 = smul.u32 6, %s254
        %s256 = ssub.s32 25, %s255
        %p257 = scmp.lt.s32.totalorder %s256, 6
        %s258 = scalar_select %p257, %s256, 6
        %s259 = smul.u32 128, %s258
        %p260 = scmp.lt.s32.totalorder %s255, 24
        %s261 = scalar_select %p260, %s255, 24
        %s262 = smul.addr %s261, 8
        %s263 = scalar_lea.vmem %s1, %s262
        %s264 = smul.u32 %s20, 3
        %s265 = sadd.s32 %s264, %s21
        %p266 = scmp.lt.s32.totalorder %s265, 4
        %s267 = scalar_select %p266, %s265, 4
        %s268 = smul.u32 6, %s267
        %s269 = ssub.s32 25, %s268
        %p270 = scmp.lt.s32.totalorder %s269, 6
        %s271 = scalar_select %p270, %s269, 6
        %s272 = smul.u32 128, %s271
        %p273 = scmp.eq.s32.totalorder %s21, 0
        // Predicated region
        $region29: #{tpu_custom_call.1} parent=27 // pred_check
          %p274 = pneg %p273
        $region30: #{tpu_custom_call.1} parent=27 // pred_check_branch
          %276 = sbr.rel (%p274) target = $region32
        $region31: #{tpu_custom_call.1} parent=27 // pred_region
          %277 = vst [vmem:[%s228] sm:$0x1] 0.0
        $region32: #{tpu_custom_call.1} parent=27 // pred_fallthru
          _
        %s278 = smul.u32 %s20, 3
        %s279 = sadd.s32 %s278, %s21
        %s280 = smul.u32 %s279, 48
        %v281 = vlaneseq
        %v282 = vshrl.u32 %v281, 7
        %v283 = vadd.s32 %v282, 8
        %v284 = vadd.s32 %v282, 16
        %v285 = vadd.s32 %v282, 24
        %v286 = vadd.s32 %v282, 32
        %v287 = vadd.s32 %v282, 40
        %v288 = vstv %s280
        %v289 = vadd.s32 %v288, %v282
        %v290 = vadd.s32 %v288, %v283
        %v291 = vadd.s32 %v288, %v284
        %v292 = vadd.s32 %v288, %v285
        %v293 = vadd.s32 %v288, %v286
        %v294 = vadd.s32 %v288, %v287
        %vm295 = vcmp.lt.s32.totalorder %v289, 200
        %vm296 = vcmp.lt.s32.totalorder %v290, 200
        %vm297 = vcmp.lt.s32.totalorder %v291, 200
        %vm298 = vcmp.lt.s32.totalorder %v292, 200
        %vm299 = vcmp.lt.s32.totalorder %v293, 200
        %vm300 = vcmp.lt.s32.totalorder %v294, 200
        %v301 = vld [vmem:[%s241] sm:$0xf]
        %v302 = vld [vmem:[%s241 + $0x4] sm:$0xf]
        %v303 = vld [vmem:[%s241 + $0x8] sm:$0xf]
        %v304 = vld [vmem:[%s241 + $0xc] sm:$0xf]
        %v305 = vld [vmem:[%s241 + $0x10] sm:$0xf]
        %v306 = vld [vmem:[%s241 + $0x14] sm:$0xf]
        %v307 = vunpack.c.l.bf16 %v301
        %v308 = vunpack.c.l.bf16 %v302
        %v309 = vunpack.c.l.bf16 %v303
        %v310 = vunpack.c.l.bf16 %v304
        %v311 = vunpack.c.l.bf16 %v305
        %v312 = vunpack.c.l.bf16 %v306
        %v313 = vld [vmem:[%s263] sm:$0xff]
        %v314 = vld [vmem:[%s263 + $0x8] sm:$0xff]
        %v315 = vld [vmem:[%s263 + $0x10] sm:$0xff]
        %v316 = vld [vmem:[%s263 + $0x18] sm:$0xff]
        %v317 = vld [vmem:[%s263 + $0x20] sm:$0xff]
        %v318 = vld [vmem:[%s263 + $0x28] sm:$0xff]
        %vm319 = vcmask 261120
        %v320 = vsel %vm319, %v307, -inf
        %321 = vmax.xlane.f32.xlu0 %v320
        %v322 = vpop.xlane.xlu0 %321
        %v323 = vsel %vm319, %v308, -inf
        %324 = vmax.xlane.f32.xlu0 %v323
        %v325 = vpop.xlane.xlu0 %324
        %v326 = vsel %vm319, %v309, -inf
        %327 = vmax.xlane.f32.xlu0 %v326
        %v328 = vpop.xlane.xlu0 %327
        %v329 = vsel %vm319, %v310, -inf
        %330 = vmax.xlane.f32.xlu0 %v329
        %v331 = vpop.xlane.xlu0 %330
        %v332 = vsel %vm319, %v311, -inf
        %333 = vmax.xlane.f32.xlu0 %v332
        %v334 = vpop.xlane.xlu0 %333
        %v335 = vsel %vm319, %v312, -inf
        %336 = vmax.xlane.f32.xlu0 %v335
        %v337 = vpop.xlane.xlu0 %336
        %v338 = vsub.f32 %v307, %v322
        %v339 = vsub.f32 %v308, %v325
        %v340 = vsub.f32 %v309, %v328
        %v341 = vsub.f32 %v310, %v331
        %v342 = vsub.f32 %v311, %v334
        %v343 = vsub.f32 %v312, %v337
        %v344 = vmul.f32 %v338, 1.442695
        %v345 = vpow.pop %v344
        %v346 = vmul.f32 %v339, 1.442695
        %v347 = vpow.pop %v346
        %v348 = vmul.f32 %v340, 1.442695
        %v349 = vpow.pop %v348
        %v350 = vmul.f32 %v341, 1.442695
        %v351 = vpow.pop %v350
        %v352 = vmul.f32 %v342, 1.442695
        %v353 = vpow.pop %v352
        %v354 = vmul.f32 %v343, 1.442695
        %v355 = vpow.pop %v354
        %v356 = vsel %vm319, %v345, 0.0
        %357 = vadd.xlane.f32.xlu0 %v356
        %v358 = vpop.xlane.xlu0 %357
        %v359 = vsel %vm319, %v347, 0.0
        %360 = vadd.xlane.f32.xlu0 %v359
        %v361 = vpop.xlane.xlu0 %360
        %v362 = vsel %vm319, %v349, 0.0
        %363 = vadd.xlane.f32.xlu0 %v362
        %v364 = vpop.xlane.xlu0 %363
        %v365 = vsel %vm319, %v351, 0.0
        %366 = vadd.xlane.f32.xlu0 %v365
        %v367 = vpop.xlane.xlu0 %366
        %v368 = vsel %vm319, %v353, 0.0
        %369 = vadd.xlane.f32.xlu0 %v368
        %v370 = vpop.xlane.xlu0 %369
        %v371 = vsel %vm319, %v355, 0.0
        %372 = vadd.xlane.f32.xlu0 %v371
        %v373 = vpop.xlane.xlu0 %372
        %v374 = vlaneseq
        %v375 = vand.u32 %v374, 127
        %376 = vset.pattern.permute.xlu0 0
        %377 = vperm.xlu0 %376, %v313
        %v378 = vpop.permute.xlu0 %377
        %379 = vset.pattern.permute.xlu0 0
        %380 = vperm.xlu0 %379, %v314
        %v381 = vpop.permute.xlu0 %380
        %382 = vset.pattern.permute.xlu0 0
        %383 = vperm.xlu0 %382, %v315
        %v384 = vpop.permute.xlu0 %383
        %385 = vset.pattern.permute.xlu0 0
        %386 = vperm.xlu0 %385, %v316
        %v387 = vpop.permute.xlu0 %386
        %388 = vset.pattern.permute.xlu0 0
        %389 = vperm.xlu0 %388, %v317
        %v390 = vpop.permute.xlu0 %389
        %391 = vset.pattern.permute.xlu0 0
        %392 = vperm.xlu0 %391, %v318
        %v393 = vpop.permute.xlu0 %392
        %vm394 = vcmp.eq.s32.totalorder %v375, %v378
        %vm395 = vcmp.eq.s32.totalorder %v375, %v381
        %vm396 = vcmp.eq.s32.totalorder %v375, %v384
        %vm397 = vcmp.eq.s32.totalorder %v375, %v387
        %vm398 = vcmp.eq.s32.totalorder %v375, %v390
        %vm399 = vcmp.eq.s32.totalorder %v375, %v393
        %v400 = vsel %vm394, %v307, 0.0
        %v401 = vsel %vm395, %v308, 0.0
        %v402 = vsel %vm396, %v309, 0.0
        %v403 = vsel %vm397, %v310, 0.0
        %v404 = vsel %vm398, %v311, 0.0
        %v405 = vsel %vm399, %v312, 0.0
        %v406 = vsel %vm319, %v400, 0.0
        %407 = vadd.xlane.f32.xlu0 %v406
        %v408 = vpop.xlane.xlu0 %407
        %v409 = vsel %vm319, %v401, 0.0
        %410 = vadd.xlane.f32.xlu0 %v409
        %v411 = vpop.xlane.xlu0 %410
        %v412 = vsel %vm319, %v402, 0.0
        %413 = vadd.xlane.f32.xlu0 %v412
        %v414 = vpop.xlane.xlu0 %413
        %v415 = vsel %vm319, %v403, 0.0
        %416 = vadd.xlane.f32.xlu0 %v415
        %v417 = vpop.xlane.xlu0 %416
        %v418 = vsel %vm319, %v404, 0.0
        %419 = vadd.xlane.f32.xlu0 %v418
        %v420 = vpop.xlane.xlu0 %419
        %v421 = vsel %vm319, %v405, 0.0
        %422 = vadd.xlane.f32.xlu0 %v421
        %v423 = vpop.xlane.xlu0 %422
        %v424 = vlog2.pop %v358
        %v425 = vmul.f32 %v424, 0.6931472
        %v426 = vlog2.pop %v361
        %v427 = vmul.f32 %v426, 0.6931472
        %v428 = vlog2.pop %v364
        %v429 = vmul.f32 %v428, 0.6931472
        %v430 = vlog2.pop %v367
        %v431 = vmul.f32 %v430, 0.6931472
        %v432 = vlog2.pop %v370
        %v433 = vmul.f32 %v432, 0.6931472
        %v434 = vlog2.pop %v373
        %v435 = vmul.f32 %v434, 0.6931472
        %v436 = vsub.f32 %v408, %v322
        %v437 = vsub.f32 %v411, %v325
        %v438 = vsub.f32 %v414, %v328
        %v439 = vsub.f32 %v417, %v331
        %v440 = vsub.f32 %v420, %v334
        %v441 = vsub.f32 %v423, %v337
        %v442 = vsub.f32 %v425, %v436
        %v443 = vsub.f32 %v427, %v437
        %v444 = vsub.f32 %v429, %v438
        %v445 = vsub.f32 %v431, %v439
        %v446 = vsub.f32 %v433, %v440
        %v447 = vsub.f32 %v435, %v441
        %v448 = vsub.f32 0.0, %v442
        %v449 = vsub.f32 0.0, %v443
        %v450 = vsub.f32 0.0, %v444
        %v451 = vsub.f32 0.0, %v445
        %v452 = vsub.f32 0.0, %v446
        %v453 = vsub.f32 0.0, %v447
        %v454 = vmul.f32 %v448, 1.442695
        %v455 = vpow.pop %v454
        %v456 = vmul.f32 %v449, 1.442695
        %v457 = vpow.pop %v456
        %v458 = vmul.f32 %v450, 1.442695
        %v459 = vpow.pop %v458
        %v460 = vmul.f32 %v451, 1.442695
        %v461 = vpow.pop %v460
        %v462 = vmul.f32 %v452, 1.442695
        %v463 = vpow.pop %v462
        %v464 = vmul.f32 %v453, 1.442695
        %v465 = vpow.pop %v464
        %v466 = vsub.f32 1.0, %v455
        %v467 = vsub.f32 1.0, %v457
        %v468 = vsub.f32 1.0, %v459
        %v469 = vsub.f32 1.0, %v461
        %v470 = vsub.f32 1.0, %v463
        %v471 = vsub.f32 1.0, %v465
        %v472 = vmax.f32 %v466, 0.0
        %v473 = vmax.f32 %v467, 0.0
        %v474 = vmax.f32 %v468, 0.0
        %v475 = vmax.f32 %v469, 0.0
        %v476 = vmax.f32 %v470, 0.0
        %v477 = vmax.f32 %v471, 0.0
        %v478 = vmul.f32 %v472, %v472
        %v479 = vmul.f32 %v473, %v473
        %v480 = vmul.f32 %v474, %v474
        %v481 = vmul.f32 %v475, %v475
        %v482 = vmul.f32 %v476, %v476
        %v483 = vmul.f32 %v477, %v477
        %v484 = vmul.f32 %v478, %v442
        %v485 = vmul.f32 %v479, %v443
        %v486 = vmul.f32 %v480, %v444
        %v487 = vmul.f32 %v481, %v445
        %v488 = vmul.f32 %v482, %v446
        %v489 = vmul.f32 %v483, %v447
        %v490 = vsel %vm295, %v484, 0.0
        %v491 = vsel %vm296, %v485, 0.0
        %v492 = vsel %vm297, %v486, 0.0
        %v493 = vsel %vm298, %v487, 0.0
        %v494 = vsel %vm299, %v488, 0.0
        %v495 = vsel %vm300, %v489, 0.0
        %vm496 = vcmask 7168
        %v497 = vsel %vm496, %v490, 0.0
        %v498 = vsel %vm496, %v491, 0.0
        %v499 = vadd.f32 %v497, %v498
        %v500 = vsel %vm496, %v492, 0.0
        %v501 = vadd.f32 %v499, %v500
        %v502 = vsel %vm496, %v493, 0.0
        %v503 = vadd.f32 %v501, %v502
        %v504 = vsel %vm496, %v494, 0.0
        %v505 = vadd.f32 %v503, %v504
        %v506 = vsel %vm496, %v495, 0.0
        %v507 = vadd.f32 %v505, %v506
        %508 = vadd.xlane.f32.xlu0 %v507
        %v509 = vpop.xlane.xlu0 %508
        %v510 = vrot.slane %v509, 4
        %v511 = vadd.f32 %v509, %v510
        %v512 = vrot.slane %v511, 2
        %v513 = vadd.f32 %v511, %v512
        %v514 = vrot.slane %v513, 1
        %v515 = vadd.f32 %v513, %v514
        %s516 = vtos %v515
        %v517 = vld [vmem:[%s228] sm:$0x1]
        %v518 = vstv %s516
        %v519 = vadd.f32 %v517, %v518
        %520 = vst [vmem:[%s228] sm:$0x1] %v519
        %s521 = sand.u32 %s104, 1
        %s522 = scalar_lea.sflag [#allocation3], %s521
        %s523 = sand.u32 %s104, 1
        %s524 = scalar_lea.vmem [#allocation2], %s523
        // Predicated region
        $region33: #{tpu_custom_call.1} parent=27 // pred_check
          %p525 = pneg %p114
        $region34: #{tpu_custom_call.1} parent=27 // pred_check_branch
          %527 = sbr.rel (%p525) target = $region36
        $region35: #{tpu_custom_call.1} parent=27 // pred_region
          %s529 = ssub.s32 16, 16
          %530 = vsyncadd %s522, %s529
          %s531 = smul.addr %s20, 16
          %s532 = scalar_lea.hbm %s2, %s531
          %s534 = sshll.u32 %s524, 4
          %s535 = int_to_ptr.vmem [resolvable:$true] %s534
          %537 = dma.vmem_to_hbm [thread:$0]  %s535, 16, %s532, %s522
        $region36: #{tpu_custom_call.1} parent=27 // pred_fallthru
          _
      $region28: #{tpu_custom_call.1} parent=5 // pred_fallthru
        _
      %p538 = scmp.le.s32.totalorder 2, %s11
      // Predicated region
      $region37: #{tpu_custom_call.1} parent=5 // pred_check
        %p539 = pneg %p538
      $region38: #{tpu_custom_call.1} parent=5 // pred_check_branch
        %541 = sbr.rel (%p539) target = $region40
      $region39: #{tpu_custom_call.1} parent=5 // pred_region
        %s542 = ssub.s32 %s11, 2
        // Predicated region
        $region41: #{tpu_custom_call.1} parent=39 // pred_check
          %p543 = pneg %p120
        $region42: #{tpu_custom_call.1} parent=39 // pred_check_branch
          %545 = sbr.rel (%p543) target = $region44
        $region43: #{tpu_custom_call.1} parent=39 // pred_region
          %s546 = sand.u32 %s105, 1
          %s547 = scalar_lea.sflag [#allocation3], %s546
          %s548 = sand.u32 %s105, 1
          %s549 = scalar_lea.vmem [#allocation2], %s548
          %550 = dma.done %s547, 16
        $region44: #{tpu_custom_call.1} parent=39 // pred_fallthru
          _
      $region40: #{tpu_custom_call.1} parent=5 // pred_fallthru
        _
    $region6: #{tpu_custom_call.1} parent=1 // loop_footer
      %s15 = sadd.s32 1, %s11
    $region7: #{tpu_custom_call.1} parent=1 // loop_footer_branch
      %10 = sbr.rel target = $region3
    $region8: #{tpu_custom_call.1} parent=1 // loop_exit
      _
    %551 = vsyncpa [#allocation3], 1
    %s552 = scalar_lea.sflag [#allocation3], 1
    %553 = vsyncpa %s552, 1

</llo_original>
